<compile_context>
chip_gen: v6e
topology: v6e:2x2x1
jax: 0.10.0
libtpu: 0.0.40
codegen_flags: <defaults>
</compile_context>

<pallas_src>
import functools

import numpy as np
import jax
import jax.numpy as jnp
from jax.experimental import pallas as pl
from jax.experimental.pallas import tpu as pltpu

M_MARGIN = 0.35
S_SCALE = 30.0


def _am_softmax_kernel(lbl_ref, emb_ref, w_ref, out_ref, inv_norm_ref, *, tc):
    # lbl_ref:      (tb, 1)  int32
    # emb_ref:      (tb, E)  bfloat16
    # w_ref:        (E, tc)  bfloat16  (raw, un-normalized weight columns)
    # out_ref:      (tb, tc) out_dtype
    # inv_norm_ref: (1, tc)  float32 VMEM scratch  (holds s / ||w_col||)
    j = pl.program_id(0)  # class-tile index (outer, "parallel")
    i = pl.program_id(1)  # batch-tile index (inner, "arbitrary")

    # Per-class scaled inverse column norm, computed once per class tile from
    # the resident bf16 weight tile; reused across all batch tiles.
    @pl.when(i == 0)
    def _():
        w32 = w_ref[...].astype(jnp.float32)
        ssq = jnp.sum(w32 * w32, axis=0, keepdims=True)          # (1, tc)
        inv_norm_ref[...] = S_SCALE * jax.lax.rsqrt(ssq)

    # bf16 operands straight into the MXU, f32 accumulation.
    cos = jnp.dot(emb_ref[...], w_ref[...],
                  preferred_element_type=jnp.float32)             # (tb, tc)
    # cos * (s / ||w_col||), clipped to +/- s  ==  s * clip(cos_theta, -1, 1).
    cos_s = jnp.clip(cos * inv_norm_ref[...], -S_SCALE, S_SCALE)
    phi_s = cos_s - S_SCALE * M_MARGIN

    # One-hot of the label class, in tile-local column coordinates.
    lbl_local = lbl_ref[...] - j * tc                             # (tb, 1)
    col_ids = jax.lax.broadcasted_iota(jnp.int32, cos_s.shape, 1)
    mask = col_ids == lbl_local

    out_ref[...] = jnp.where(mask, phi_s, cos_s).astype(out_ref.dtype)


def _footprint_bytes(tb, tc, E, out_bytes):
    emb = 2 * tb * E * 2          # bf16 block, double-buffered
    wgt = 2 * E * tc * 2          # bf16 block, double-buffered
    lbl = 2 * tb * 128 * 4        # int32 (tb, 1) block, lane-padded to 128
    out = 2 * tb * tc * out_bytes
    scr = 8 * tc * 4              # inv_norm scratch, sublane-padded
    tmp = E * tc * 4              # f32 temp for the in-kernel norm reduce
    return emb + wgt + lbl + out + scr + tmp


def am_softmax(embeddings, weight, labels, *, tb=None, tc=None,
               out_dtype=jnp.bfloat16, vmem_budget=24 * 1024 * 1024):
    """AM-softmax forward.

    embeddings: [B, E], weight: [E, C] (pass a persistently-bf16 weight for
    best perf -- cast once at init, not per call), labels: [B] int.
    Returns [B, C] in out_dtype.
    """
    B, E = embeddings.shape
    E2, C = weight.shape
    assert E == E2, (E, E2)
    out_bytes = np.dtype(out_dtype).itemsize

    # ---- class tile --------------------------------------------------------
    if tc is None:
        tc = C  # fallback: one (masked-store) class tile.
        for cand in (1024, 512, 256, 128):
            if C % cand == 0 and _footprint_bytes(8, cand, E, out_bytes) <= vmem_budget:
                tc = cand
                break
    assert C % tc == 0, (C, tc)

    # ---- batch tile --------------------------------------------------------
    if tb is None:
        b_resident = -(-B // 8) * 8   # full batch, rounded to sublane multiple
        if _footprint_bytes(b_resident, tc, E, out_bytes) <= vmem_budget:
            tb = b_resident           # embeddings fully resident (DMA'd once)
        else:
            tb = 8
            for cand in (1024, 512, 256, 128, 64, 32, 16, 8):
                if _footprint_bytes(cand, tc, E, out_bytes) <= vmem_budget:
                    tb = cand
                    break

    # ---- pad batch to a multiple of tb --------------------------------------
    Bp = -(-B // tb) * tb
    if Bp != B:
        embeddings = jnp.pad(embeddings, ((0, Bp - B), (0, 0)))
        labels = jnp.pad(labels, (0, Bp - B))

    if embeddings.dtype != jnp.bfloat16:
        embeddings = embeddings.astype(jnp.bfloat16)
    if weight.dtype != jnp.bfloat16:
        # Per-call fallback; prefer casting the classifier weight once at init.
        weight = weight.astype(jnp.bfloat16)
    labels2d = labels.reshape(Bp, 1).astype(jnp.int32)

    footprint = _footprint_bytes(tb, tc, E, out_bytes)
    vmem_limit = int(min(48 * 1024 * 1024,
                         max(32 * 1024 * 1024, footprint + (8 << 20))))

    kernel = functools.partial(_am_softmax_kernel, tc=tc)

    out = pl.pallas_call(
        kernel,
        out_shape=jax.ShapeDtypeStruct((Bp, C), out_dtype),
        grid_spec=pltpu.PrefetchScalarGridSpec(
            num_scalar_prefetch=0,
            grid=(C // tc, Bp // tb),      # class axis OUTER, batch axis INNER
            in_specs=[
                pl.BlockSpec((tb, 1), lambda j, i: (i, 0)),   # labels
                pl.BlockSpec((tb, E), lambda j, i: (i, 0)),   # embeddings (bf16)
                pl.BlockSpec((E, tc), lambda j, i: (0, j)),   # weight cols (bf16)
            ],
            out_specs=pl.BlockSpec((tb, tc), lambda j, i: (i, j)),
            scratch_shapes=[pltpu.VMEM((1, tc), jnp.float32)],
        ),
        compiler_params=pltpu.CompilerParams(
            dimension_semantics=("parallel", "arbitrary"),
            vmem_limit_bytes=vmem_limit,
        ),
    )(labels2d, embeddings, weight)

    return out[:B] if Bp != B else out


def am_softmax_ref(embeddings, weight, labels, *, operand_dtype=jnp.float32):
    """Pure-JAX reference mirroring the PyTorch forward."""
    w = weight.astype(operand_dtype)
    x = embeddings.astype(operand_dtype)
    w32 = w.astype(jnp.float32)
    inv_norm = jax.lax.rsqrt(jnp.sum(w32 * w32, axis=0, keepdims=True))
    cos = jnp.dot(x, w, preferred_element_type=jnp.float32) * inv_norm
    cos = jnp.clip(cos, -1.0, 1.0)
    phi = cos - M_MARGIN
    one_hot = labels[:, None] == jnp.arange(cos.shape[1])[None, :]
    return jnp.where(one_hot, phi, cos) * S_SCALE


if __name__ == "__main__":
    # Small deterministic shapes consistent with the module's forward:
    # embeddings [B, E], kernel [E, C], labels [B].
    B, E, C = 8, 32, 256

    key = jax.random.PRNGKey(0)
    k_emb, k_w, k_lbl = jax.random.split(key, 3)

    embeddings = jax.random.normal(k_emb, (B, E), dtype=jnp.float32)
    # Deterministic synthetic init mirroring uniform_(-1, 1); the
    # renorm_().mul_() rescale in __init__ is a no-op after forward's
    # per-column L2 normalization.
    weight = jax.random.uniform(k_w, (E, C), dtype=jnp.float32,
                                minval=-1.0, maxval=1.0)
    labels = jax.random.randint(k_lbl, (B,), 0, C, dtype=jnp.int32)

    # Persistent bf16 classifier weight: cast once (at "init"), not per call.
    weight_bf16 = weight.astype(jnp.bfloat16)

    # Default (bf16 output) fast path.
    out = jax.block_until_ready(am_softmax(embeddings, weight_bf16, labels))
    assert out.shape == (B, C) and out.dtype == jnp.bfloat16

    # Tight check: f32-output kernel vs a reference using the same bf16
    # operands / bf16-derived column norms.
    out_f32 = jax.block_until_ready(
        am_softmax(embeddings, weight_bf16, labels, out_dtype=jnp.float32))
    ref_bf16 = am_softmax_ref(embeddings, weight, labels,
                              operand_dtype=jnp.bfloat16)
    assert jnp.allclose(out_f32, ref_bf16, atol=2e-2, rtol=1e-3), float(
        jnp.max(jnp.abs(out_f32 - ref_bf16)))

    # Looser sanity check vs the full-f32 PyTorch-equivalent reference
    # (bf16 operands + bf16 output quantize at the ~1e-1 level after the *30).
    ref_f32 = am_softmax_ref(embeddings, weight, labels)
    err = jnp.abs(out.astype(jnp.float32) - ref_f32)
    assert jnp.allclose(out.astype(jnp.float32), ref_f32, atol=0.5, rtol=5e-2), float(
        jnp.max(err))

    print("KERNEL_OK")
</pallas_src>

<mosaic_0001>
module attributes {stable_mosaic.version = 11 : i64} {
  func.func @_am_softmax_kernel(%arg0: i32, %arg1: i32, %arg2: memref<8x1xi32, #tpu.memory_space<vmem>>, %arg3: memref<8x32xbf16, #tpu.memory_space<vmem>>, %arg4: memref<32x256xbf16, #tpu.memory_space<vmem>>, %arg5: memref<8x256xbf16, #tpu.memory_space<vmem>>, %arg6: memref<1x256xf32, #tpu.memory_space<vmem>>) attributes {dimension_semantics = [#tpu.dimension_semantics<parallel>, #tpu.dimension_semantics<arbitrary>], iteration_bounds = array<i64: 1, 1>, scalar_prefetch = 0 : i64, scratch_operands = 1 : i64, tpu.core_type = #tpu.core_type<tc>, window_params = [{transform_indices = @transform_0, window_bounds = array<i64: 8, 1>}, {transform_indices = @transform_1, window_bounds = array<i64: 8, 32>}, {transform_indices = @transform_2, window_bounds = array<i64: 32, 256>}, {transform_indices = @transform_3, window_bounds = array<i64: 8, 256>}]} {
    %c0_i32 = arith.constant 0 : i32
    %0 = arith.cmpi eq, %arg1, %c0_i32 : i32
    %1 = arith.extui %0 : i1 to i32
    %c0_i32_0 = arith.constant 0 : i32
    %2 = arith.cmpi ne, %1, %c0_i32_0 : i32
    scf.if %2 {
      %c0_13 = arith.constant 0 : index
      %c0_14 = arith.constant 0 : index
      %25 = vector.load %arg4[%c0_13, %c0_14] : memref<32x256xbf16, #tpu.memory_space<vmem>>, vector<32x256xbf16>
      %26 = arith.extf %25 : vector<32x256xbf16> to vector<32x256xf32>
      %27 = arith.mulf %26, %26 : vector<32x256xf32>
      %cst_15 = arith.constant dense<0.000000e+00> : vector<256xf32>
      %28 = vector.multi_reduction <add>, %27, %cst_15 [0] : vector<32x256xf32> to vector<256xf32>
      %29 = vector.shape_cast %28 : vector<256xf32> to vector<1x256xf32>
      %30 = math.rsqrt %29 : vector<1x256xf32>
      %cst_16 = arith.constant 3.000000e+01 : f32
      %31 = vector.broadcast %cst_16 : f32 to vector<1x256xf32>
      %32 = arith.mulf %31, %30 : vector<1x256xf32>
      %c0_17 = arith.constant 0 : index
      %c0_18 = arith.constant 0 : index
      %33 = vector.load %arg6[%c0_17, %c0_18] : memref<1x256xf32, #tpu.memory_space<vmem>>, vector<1x256xf32>
      tpu.vector_store %arg6[%c0_17, %c0_18], %32 {strides = array<i32>} : memref<1x256xf32, #tpu.memory_space<vmem>>, vector<1x256xf32>,
    } else {
    }
    %c0 = arith.constant 0 : index
    %c0_1 = arith.constant 0 : index
    %3 = vector.load %arg3[%c0, %c0_1] : memref<8x32xbf16, #tpu.memory_space<vmem>>, vector<8x32xbf16>
    %c0_2 = arith.constant 0 : index
    %c0_3 = arith.constant 0 : index
    %4 = vector.load %arg4[%c0_2, %c0_3] : memref<32x256xbf16, #tpu.memory_space<vmem>>, vector<32x256xbf16>
    %cst = arith.constant dense<0.000000e+00> : vector<8x256xf32>
    %5 = tpu.matmul %3, %4, %cst {dimension_numbers = #tpu.dot_dimension_numbers<[1], [0], [0], [1], [0, 0, 1, 1], [], []>} : vector<8x32xbf16>, vector<32x256xbf16>, vector<8x256xf32> -> vector<8x256xf32>
    %c0_4 = arith.constant 0 : index
    %c0_5 = arith.constant 0 : index
    %6 = vector.load %arg6[%c0_4, %c0_5] : memref<1x256xf32, #tpu.memory_space<vmem>>, vector<1x256xf32>
    %7 = vector.broadcast %6 : vector<1x256xf32> to vector<8x256xf32>
    %8 = arith.mulf %5, %7 : vector<8x256xf32>
    %cst_6 = arith.constant -3.000000e+01 : f32
    %cst_7 = arith.constant 3.000000e+01 : f32
    %9 = vector.broadcast %cst_6 : f32 to vector<8x256xf32>
    %10 = arith.maximumf %9, %8 : vector<8x256xf32>
    %11 = vector.broadcast %cst_7 : f32 to vector<8x256xf32>
    %12 = arith.minimumf %11, %10 : vector<8x256xf32>
    %cst_8 = arith.constant 1.050000e+01 : f32
    %13 = vector.broadcast %cst_8 : f32 to vector<8x256xf32>
    %14 = arith.subf %12, %13 : vector<8x256xf32>
    %c0_9 = arith.constant 0 : index
    %c0_10 = arith.constant 0 : index
    %15 = vector.load %arg2[%c0_9, %c0_10] : memref<8x1xi32, #tpu.memory_space<vmem>>, vector<8x1xi32>
    %c256_i32 = arith.constant 256 : i32
    %16 = arith.muli %arg0, %c256_i32 : i32
    %17 = vector.broadcast %16 : i32 to vector<8x1xi32>
    %18 = arith.subi %15, %17 : vector<8x1xi32>
    %19 = tpu.iota {dimensions = array<i32: 1>} : vector<8x256xi32>
    %20 = vector.broadcast %18 : vector<8x1xi32> to vector<8x256xi32>
    %21 = arith.cmpi eq, %19, %20 : vector<8x256xi32>
    %22 = arith.select %21, %14, %12 : vector<8x256xi1>, vector<8x256xf32>
    %23 = arith.truncf %22 : vector<8x256xf32> to vector<8x256xbf16>
    %c0_11 = arith.constant 0 : index
    %c0_12 = arith.constant 0 : index
    %24 = vector.load %arg5[%c0_11, %c0_12] : memref<8x256xbf16, #tpu.memory_space<vmem>>, vector<8x256xbf16>
    tpu.vector_store %arg5[%c0_11, %c0_12], %23 {strides = array<i32>} : memref<8x256xbf16, #tpu.memory_space<vmem>>, vector<8x256xbf16>,
    return
  }
  func.func @transform_0(%arg0: i32, %arg1: i32) -> (i32, i32) {
    %c0_i32 = arith.constant 0 : i32
    %c0_i32_0 = arith.constant 0 : i32
    return %arg1, %c0_i32 : i32, i32
  }
  func.func @transform_1(%arg0: i32, %arg1: i32) -> (i32, i32) {
    %c0_i32 = arith.constant 0 : i32
    %c0_i32_0 = arith.constant 0 : i32
    return %arg1, %c0_i32 : i32, i32
  }
  func.func @transform_2(%arg0: i32, %arg1: i32) -> (i32, i32) {
    %c0_i32 = arith.constant 0 : i32
    %c0_i32_0 = arith.constant 0 : i32
    return %c0_i32, %arg0 : i32, i32
  }
  func.func @transform_3(%arg0: i32, %arg1: i32) -> (i32, i32) {
    %c0_i32 = arith.constant 0 : i32
    return %arg1, %arg0 : i32, i32
  }
}

</mosaic_0001>

<llo_original>
// kernel: tpu_custom_call.1
$region0: #{tpu_custom_call.1}
  #allocation0 [shape = 'u32[]', space=smem, size = 0x4, offset = 0x4, fixed_abs, tag = 'smem constant byte address 0x4 - core index']
  #allocation1 [shape = 'u32[144,128]{1,0:T(1,128)}', space=vmem, size = 0x12000, scoped, tag = 'internal scratch']
  #allocation2 [shape = 'f32[1,256]{1,0:T(1,128)}', space=vmem, size = 0x400, scoped, tag = 'scratch operand']
  %s0 = inlined_call_operand.vmem [shape: s32[8,1], index: 0, kind: input, shape index: {}]
  %s1 = inlined_call_operand.vmem [shape: bf16[8,32], index: 1, kind: input, shape index: {}]
  %s2 = inlined_call_operand.hbm [shape: bf16[32,256], index: 2, kind: input, shape index: {}]
  %s3 = inlined_call_operand.hbm [shape: bf16[8,256], index: 3, kind: output, shape index: {}]
  %s4 = sld [smem:[#allocation0]]
  $region30: #{tpu_custom_call.1} parent=0
    _
  %s6 = ssub.s32 1, %s4
  %s7 = scalar_select 0, %s6, %s4
  $region1: #{tpu_custom_call.1} parent=0
    #allocation3 [shape = 'u8[16384]{0}', space=vmem, size = 0x4000, scoped, tag = 'input window, operand 2, single buffered']
    #allocation4 [shape = 's32[1]{0}', space=sflag, size = 0x4, scoped, tag = 'scoped memory for tpu_custom_call.1']
    #allocation5 [shape = 's32[1]{0}', space=sflag, size = 0x4, scoped, tag = 'scoped memory for tpu_custom_call.1']
    #allocation6 [shape = 'u8[4096]{0}', space=vmem, size = 0x1000, scoped, tag = 'output window, operand 0, single buffered']
    %8 = vsyncpa [#allocation4], 0
    %9 = vsyncpa [#allocation5], 0
    // Predicated region
    $region2: #{tpu_custom_call.1} parent=1 // pred_check
      _
    $region3: #{tpu_custom_call.1} parent=1 // pred_check_branch
      %11 = sbr.rel (0) target = $region5
    $region4: #{tpu_custom_call.1} parent=1 // pred_region
      _
    $region5: #{tpu_custom_call.1} parent=1 // pred_fallthru
      _
    // Predicated region
    $region6: #{tpu_custom_call.1} parent=1 // pred_check
      _
    $region7: #{tpu_custom_call.1} parent=1 // pred_check_branch
      %13 = sbr.rel (0) target = $region9
    $region8: #{tpu_custom_call.1} parent=1 // pred_region
      _
    $region9: #{tpu_custom_call.1} parent=1 // pred_fallthru
      _
    // Predicated region
    $region10: #{tpu_custom_call.1} parent=1 // pred_check
      _
    $region11: #{tpu_custom_call.1} parent=1 // pred_check_branch
      %15 = sbr.rel (0) target = $region13
    $region12: #{tpu_custom_call.1} parent=1 // pred_region
      %s17 = ssub.s32 512, 512
      %18 = vsyncadd [#allocation4], %s17
      %s19 = sshll.u32 [#allocation3], 4
      %s20 = int_to_ptr.vmem [resolvable:$true] %s19
      %25 = dma.hbm_to_vmem [thread:$0]  %s2, 512, %s20, [#allocation4], 128, 128, 8
    $region13: #{tpu_custom_call.1} parent=1 // pred_fallthru
      _
    // Predicated region
    $region14: #{tpu_custom_call.1} parent=1 // pred_check
      _
    $region15: #{tpu_custom_call.1} parent=1 // pred_check_branch
      %27 = sbr.rel (0) target = $region17
    $region16: #{tpu_custom_call.1} parent=1 // pred_region
      %28 = dma.done [#allocation4], 512
    $region17: #{tpu_custom_call.1} parent=1 // pred_fallthru
      _
    %p30 = scmp.eq.s32.totalorder 0, 0
    // Predicated region
    $region18: #{tpu_custom_call.1} parent=1 // pred_check
      %p31 = pneg %p30
    $region19: #{tpu_custom_call.1} parent=1 // pred_check_branch
      %33 = sbr.rel (%p31) target = $region21
    $region20: #{tpu_custom_call.1} parent=1 // pred_region
      %v34 = vld [vmem:[#allocation3] sm:$0xff]
      %v35 = vld [vmem:[#allocation3 + $0x8] sm:$0xff]
      %v36 = vld [vmem:[#allocation3 + $0x10] sm:$0xff]
      %v37 = vld [vmem:[#allocation3 + $0x18] sm:$0xff]
      %v38 = vunpack.c.l.bf16 %v34
      %v39 = vunpack.c.h.bf16 %v34
      %v40 = vunpack.c.l.bf16 %v35
      %v41 = vunpack.c.h.bf16 %v35
      %v42 = vunpack.c.l.bf16 %v36
      %v43 = vunpack.c.h.bf16 %v36
      %v44 = vunpack.c.l.bf16 %v37
      %v45 = vunpack.c.h.bf16 %v37
      %v46 = vmul.f32 %v38, %v38
      %v47 = vmul.f32 %v39, %v39
      %v48 = vmul.f32 %v40, %v40
      %v49 = vmul.f32 %v41, %v41
      %v50 = vmul.f32 %v42, %v42
      %v51 = vmul.f32 %v43, %v43
      %v52 = vmul.f32 %v44, %v44
      %v53 = vmul.f32 %v45, %v45
      %v54 = vadd.f32 %v46, %v48
      %v55 = vadd.f32 %v54, %v50
      %v56 = vadd.f32 %v55, %v52
      %v57 = vrot.slane %v56, 4
      %v58 = vadd.f32 %v56, %v57
      %v59 = vrot.slane %v58, 2
      %v60 = vadd.f32 %v58, %v59
      %v61 = vrot.slane %v60, 1
      %v62 = vadd.f32 %v60, %v61
      %v63 = vadd.f32 %v47, %v49
      %v64 = vadd.f32 %v63, %v51
      %v65 = vadd.f32 %v64, %v53
      %v66 = vrot.slane %v65, 4
      %v67 = vadd.f32 %v65, %v66
      %v68 = vrot.slane %v67, 2
      %v69 = vadd.f32 %v67, %v68
      %v70 = vrot.slane %v69, 1
      %v71 = vadd.f32 %v69, %v70
      %v72 = vrsqrt.pop %v62
      %v73 = vrsqrt.pop %v71
      %v74 = vmul.f32 %v72, 30.0
      %v75 = vmul.f32 %v73, 30.0
      %v78 = vcombine.low %v74, %v75
      %v80 = vunpack.c.l.s4 1966171168
      %v81 = vunpack.c.0.s8 %v80
      %v82 = vlaneseq
      %v83 = vshrl.u32 %v82, 7
      %v84 = vsub.s32 %v81, %v83
      %v85 = vrot.slane %v78, %v84
      %v87 = vunpack.c.l.s4 1966171168
      %v88 = vunpack.c.0.s8 %v87
      %v89 = vlaneseq
      %v90 = vshrl.u32 %v89, 7
      %v91 = vsub.s32 %v88, %v90
      %v92 = vrot.slane %v85, %v91
      %v94 = vlaneseq
      %vm95 = vcmp.ge.s32.totalorder %v94, 0
      %vm96 = vcmp.lt.s32.totalorder %v94, 256
      %vm97 = vmand %vm95, %vm96
      %98 = vst.msk [vmem:[#allocation2] sm:$0x3] %vm97, %v92
    $region21: #{tpu_custom_call.1} parent=1 // pred_fallthru
      _
    %v99 = vld [vmem:[%s1] sm:$0xf]
    %v100 = vld [vmem:[#allocation3] sm:$0xff]
    %v101 = vld [vmem:[#allocation3 + $0x8] sm:$0xff]
    %v102 = vld [vmem:[#allocation3 + $0x10] sm:$0xff]
    %v103 = vld [vmem:[#allocation3 + $0x18] sm:$0xff]
    %v108 = vunpack.c.l.b16 %v100
    %v109 = vunpack.c.h.b16 %v100
    %v110 = vunpack.c.l.b16 %v101
    %v111 = vunpack.c.h.b16 %v101
    %v112 = vunpack.c.l.b16 %v102
    %v113 = vunpack.c.h.b16 %v102
    %v114 = vunpack.c.l.b16 %v103
    %v115 = vunpack.c.h.b16 %v103
    %v116 = vpack.c.b16 %v110, %v108
    %v117 = vpack.c.b16 %v111, %v109
    %v118 = vpack.c.b16 %v114, %v112
    %v119 = vpack.c.b16 %v115, %v113
    %vm124 = vcmask 261120
    %v126 = vsel %vm124, %v99, 0
    %128 = vmatprep.subr.bf16.mxu0 0
    %129 = vmatpush1.bf16.msra.mxu0 0
    %130 = vmatprep.subr.bf16.mxu0 0
    %131 = vmatpush1.bf16.msra.mxu0 0
    %132 = vmatprep.subr.bf16.mxu0 0
    %133 = vmatpush1.bf16.msra.mxu0 0
    %134 = vmatprep.subr.bf16.mxu0 0
    %135 = vmatpush1.bf16.msra.mxu0 0
    %136 = vmatprep.subr.bf16.mxu0 0
    %137 = vmatpush1.bf16.msra.mxu0 0
    %138 = vmatprep.subr.bf16.mxu0 0
    %139 = vmatpush1.bf16.msra.mxu0 0
    %140 = vmatprep.subr.bf16.mxu0 %v119
    %141 = vmatpush1.bf16.msra.mxu0 %v118
    %142 = vmatprep.subr.bf16.mxu0 %v117
    %143 = vmatpush1.bf16.msra.mxu0 %v116
    %144 = vmatprep.subr.bf16.mxu0 0
    %145 = vmatpush2.bf16.msra.mxu0 0
    %146 = vmatprep.subr.bf16.mxu0 0
    %147 = vmatpush2.bf16.msra.mxu0 0
    %148 = vmatprep.subr.bf16.mxu0 0
    %149 = vmatpush2.bf16.msra.mxu0 0
    %150 = vmatprep.subr.bf16.mxu0 0
    %151 = vmatpush2.bf16.msra.mxu0 0
    %152 = vmatprep.subr.bf16.mxu0 0
    %153 = vmatpush2.bf16.msra.mxu0 0
    %154 = vmatprep.subr.bf16.mxu0 0
    %155 = vmatpush2.bf16.msra.mxu0 0
    %156 = vmatprep.subr.bf16.mxu0 0
    %157 = vmatpush2.bf16.msra.mxu0 0
    %158 = vmatprep.subr.bf16.mxu0 0
    %159 = vmatpush2.bf16.msra.mxu0 0
    %160 = vmatprep.mubr.bf16.mxu0 0
    %161 = vmatmul.mubr.bf16.gmra.mxu0 %v126
    %v162 = vpop.f32.mrf.mxu0
    %v163 = vadd.f32 0.0, %v162
    %v164 = vpop.f32.mrf.mxu0
    %v165 = vadd.f32 0.0, %v164
    %v166 = vpop.f32.mrf.mxu0
    %v167 = vpop.f32.mrf.mxu0
    %168 = vdwg.mxu0
    %v169 = vld [vmem:[#allocation2] sm:$0x3]
    %v171 = vlaneseq
    %v172 = vshrl.u32 %v171, 7
    %v173 = vsub.s32 0, %v172
    %v174 = vrot.slane %v169, %v173
    %v175 = vlaneseq
    %v176 = vshrl.u32 %v175, 7
    %v177 = vsub.s32 1, %v176
    %v178 = vrot.slane %v169, %v177
    %v181 = vmul.f32 %v163, %v174
    %v182 = vmul.f32 %v165, %v178
    %v183 = vmax.f32 %v181, -30.0
    %v184 = vmax.f32 %v182, -30.0
    %v185 = vmin.f32 %v183, 30.0
    %v186 = vmin.f32 %v184, 30.0
    %v187 = vsub.f32 %v185, 10.5
    %v188 = vsub.f32 %v186, 10.5
    %v189 = vld [vmem:[%s0] sm:$0xff]
    %s190 = smul.u32 0, 256
    %v191 = vstv %s190
    %v192 = vsub.s32 %v189, %v191
    %v193 = vlaneseq
    %v194 = vand.u32 %v193, 127
    %v195 = vadd.s32 %v194, 128
    %196 = vset.pattern.permute.xlu0 0
    %197 = vperm.xlu0 %196, %v192
    %v198 = vpop.permute.xlu0 %197
    %vm199 = vcmp.eq.s32.totalorder %v194, %v198
    %vm200 = vcmp.eq.s32.totalorder %v195, %v198
    %v201 = vsel %vm199, %v187, %v185
    %v202 = vsel %vm200, %v188, %v186
    %v203 = vpack.c.bf16 %v201, %v201
    %v204 = vpack.c.bf16 %v202, %v202
    %v207 = vunpack.c.l.b16 %v203
    %v208 = vunpack.c.l.b16 %v204
    %v209 = vpack.c.b16 %v208, %v207
    %211 = vst [vmem:[#allocation6] sm:$0xff] %v209
    // Predicated region
    $region22: #{tpu_custom_call.1} parent=1 // pred_check
      _
    $region23: #{tpu_custom_call.1} parent=1 // pred_check_branch
      %213 = sbr.rel (0) target = $region25
    $region24: #{tpu_custom_call.1} parent=1 // pred_region
      %s215 = ssub.s32 128, 128
      %216 = vsyncadd [#allocation5], %s215
      %s218 = sshll.u32 [#allocation6], 4
      %s219 = int_to_ptr.vmem [resolvable:$true] %s218
      %221 = dma.vmem_to_hbm [thread:$0]  %s219, 128, %s3, [#allocation5]
    $region25: #{tpu_custom_call.1} parent=1 // pred_fallthru
      _
    // Predicated region
    $region26: #{tpu_custom_call.1} parent=1 // pred_check
      _
    $region27: #{tpu_custom_call.1} parent=1 // pred_check_branch
      %223 = sbr.rel (0) target = $region29
    $region28: #{tpu_custom_call.1} parent=1 // pred_region
      %224 = dma.done [#allocation5], 128
    $region29: #{tpu_custom_call.1} parent=1 // pred_fallthru
      _
    %225 = vsyncpa [#allocation4], 1
    %226 = vsyncpa [#allocation5], 1

</llo_original>
